<compile_context>
chip_gen: v7x
topology: tpu7x:2x2x1
jax: 0.10.0
libtpu: 0.0.40
codegen_flags: <defaults>
</compile_context>

<pallas_src>
import jax
import jax.numpy as jnp
import numpy as np
from jax.experimental import pallas as pl
from jax.experimental.pallas import tpu as pltpu

NEGINF = -1e20  # ParlAI neginf(float32); plain Python literal.


# ----------------------------- Pallas kernels ------------------------------ #

def shifter_score_kernel(qcat_ref, wc_ref, bc_ref, wk_ref, bk_ref, pool_ref,
                         score_ref):
    """Fused project_c_q_k / (folded) project_k / bmm-score.

    Per grid step (one row-tile of TN batch rows):
      qcat_ref : [TN, 2H]    bf16  (query || tracked_knowledge)
      wc_ref   : [2H, H]     bf16  (Wc^T, resident)
      bc_ref   : [1, H]      f32
      wk_ref   : [H, H]      bf16  (Wk in torch [out,in] orientation, resident)
      bk_ref   : [1, H]      f32
      pool_ref : [TN, K, H]  native dtype (never touches the MXU)
      score_ref: [TN, K_PAD] f32   (lane-dense output, padding = NEGINF)
    """
    tn, k, _ = pool_ref.shape
    k_pad = score_ref.shape[-1]

    # Query projection — computed once per batch row, reused for all K cands.
    cq = jnp.dot(qcat_ref[...], wc_ref[...],
                 preferred_element_type=jnp.float32) + bc_ref[...]       # [TN,H]
    # Fold project_k into the query path: u = cq @ Wk.
    u = jnp.dot(cq.astype(wk_ref.dtype), wk_ref[...],
                preferred_element_type=jnp.float32)                      # [TN,H]
    # Bias term of project_k folds into a per-row scalar: dot(bk, cq[n]).
    c0 = jnp.sum(cq * bk_ref[...], axis=-1, keepdims=True)               # [TN,1]

    # score[n,k] = dot(pool[n,k], u[n]) + c0[n]   (VPU mul + lane reduce)
    score = jnp.sum(pool_ref[...].astype(jnp.float32) * u[:, None, :],
                    axis=-1) + c0                                        # [TN,K]

    if k_pad > k:
        score_ref[...] = jnp.full((tn, k_pad), NEGINF, dtype=score_ref.dtype)
        score_ref[:, :k] = score          # tiny masked VMEM store; HBM writeback
    else:                                 # of the block stays full-lane-width.
        score_ref[...] = score


def gather_selected_kernel(ids_ref, pool_hbm_ref, out_hbm_ref, copy_sems):
    """pool_tokens[n, ids[n]] -> out[n] via HBM->HBM DMA, `depth` copies in flight."""
    n_rows = out_hbm_ref.shape[0]
    depth = copy_sems.shape[0]

    def start(r):
        pltpu.make_async_copy(pool_hbm_ref.at[r, ids_ref[r]],
                              out_hbm_ref.at[r],
                              copy_sems.at[r % depth]).start()

    # Prime the pipeline with `depth` outstanding copies (static Python loop).
    for r in range(min(depth, n_rows)):
        start(r)

    @pl.loop(0, n_rows)
    def _(r):
        # Wait row r's copy, then refill its semaphore slot with row r+depth.
        pltpu.make_async_copy(pool_hbm_ref.at[0, 0], out_hbm_ref.at[0],
                              copy_sems.at[r % depth]).wait()

        @pl.when(r + depth < n_rows)
        def _():
            start(r + depth)


# ------------------------------- wrapper ----------------------------------- #

def init_params(key, hidden, mxu_dtype=jnp.bfloat16):
    k1, k2, k3, k4 = jax.random.split(key, 4)
    w_cqk = jax.random.normal(k1, (hidden, 2 * hidden), jnp.float32) * 0.05  # torch [out,in]
    b_cqk = jax.random.normal(k2, (hidden,), jnp.float32) * 0.05
    w_k = jax.random.normal(k3, (hidden, hidden), jnp.float32) * 0.05        # torch [out,in]
    b_k = jax.random.normal(k4, (hidden,), jnp.float32) * 0.05
    return {"Wc_t": w_cqk.T.astype(mxu_dtype),     # [2H, H]  (qcat @ Wc_t)
            "bc": b_cqk[None, :],                  # [1, H]
            "Wk": w_k.astype(mxu_dtype),           # [H, H]   torch orientation (for cq @ Wk)
            "bk": b_k[None, :]}                    # [1, H]


def _choose_row_tile(n, k, h, k_pad, pool_itemsize):
    """Largest safe row tile: budgets the full per-step VMEM working set."""
    budget = 10 * 1024 * 1024   # fits v5e 16 MiB scoped default & v7x 32 MiB

    def vmem_bytes(tn):
        b = 2 * tn * 2 * h * 2                    # qcat blocks, bf16, double-buffered
        b += 2 * (2 * h * h + h * h) * 2          # Wc^T + Wk resident (x2 bufs), bf16
        b += 2 * 2 * h * 4                        # bc + bk
        b += 2 * tn * k * h * pool_itemsize       # pool blocks, double-buffered
        b += 2 * tn * k_pad * 4                   # score blocks, f32
        b += tn * k * h * 4                       # mul-reduce intermediate headroom
        b += 2 * tn * h * 4                       # cq / u intermediates
        return b

    if vmem_bytes(n) <= budget:
        return n
    for tn in (1024, 768, 512, 256):              # prefer MXU-M-friendly multiples of 256
        if tn <= n and vmem_bytes(tn) <= budget:
            return tn
    tn = min(256, max(8, (n // 8) * 8))
    while tn > 8 and vmem_bytes(tn) > budget:
        tn -= 8
    return max(tn, 8)


def knowledge_shifter_forward(params, contexts_encoded, tracked_knowledge_use,
                              knowledge_shifting_pool_encoded,
                              knowledge_shifting_pool_mask,
                              shifting_ck_mask,
                              knowledge_shifting_label,
                              knowledge_shifting_pool,
                              mode="train"):
    ctx_pooled = contexts_encoded[1]                          # [N, >=3, H]
    query_use = ctx_pooled[:, 2, :]                           # [N, H]
    pool_tokens, pool_use = knowledge_shifting_pool_encoded   # [N,K,T,H], [N,K,H]
    N, K, T, H = pool_tokens.shape

    mxu_dtype = params["Wc_t"].dtype
    qcat = jnp.concatenate([query_use, tracked_knowledge_use],
                           axis=1).astype(mxu_dtype)          # [N, 2H] (tiny cast)

    K_PAD = max(128, ((K + 127) // 128) * 128)
    tn = _choose_row_tile(N, K, H, K_PAD, pool_use.dtype.itemsize)
    grid = (pl.cdiv(N, tn),)

    score_padded = pl.pallas_call(
        shifter_score_kernel,
        out_shape=jax.ShapeDtypeStruct((N, K_PAD), jnp.float32),
        grid_spec=pltpu.PrefetchScalarGridSpec(
            num_scalar_prefetch=0,
            grid=grid,
            in_specs=[
                pl.BlockSpec((tn, 2 * H), lambda i: (i, 0)),     # qcat rows
                pl.BlockSpec((2 * H, H), lambda i: (0, 0)),      # Wc^T (resident)
                pl.BlockSpec((1, H), lambda i: (0, 0)),          # bc
                pl.BlockSpec((H, H), lambda i: (0, 0)),          # Wk (resident)
                pl.BlockSpec((1, H), lambda i: (0, 0)),          # bk
                pl.BlockSpec((tn, K, H), lambda i: (i, 0, 0)),   # pool_use rows (native dtype)
            ],
            out_specs=pl.BlockSpec((tn, K_PAD), lambda i: (i, 0)),
        ),
        compiler_params=pltpu.CompilerParams(
            dimension_semantics=("parallel",),        # v7x: shard row tiles over 2 TCs
            vmem_limit_bytes=32 * 1024 * 1024),
    )(qcat, params["Wc_t"], params["bc"], params["Wk"], params["bk"], pool_use)

    # masked_fill_(~shifting_ck_mask, neginf) on the tiny [N, K] slice (XLA).
    knowledge_shifting_score = jnp.where(shifting_ck_mask,
                                         score_padded[:, :K], NEGINF)

    if mode == "inference":
        # TODO(synk): fold the masked argmax into the score-kernel epilogue to
        # avoid one tiny extra XLA launch before the gather.
        knowledge_shifting_ids = jnp.argmax(knowledge_shifting_score,
                                            axis=1).astype(jnp.int32)
    else:  # 'train'
        knowledge_shifting_ids = knowledge_shifting_label.astype(jnp.int32)

    # Selected-candidate gather of the big [N,K,T,H] tensor: depth-pipelined
    # HBM->HBM DMAs driven by the scalar-prefetched id table.
    depth = int(min(4, N))
    shifted_knowledge_encoded = pl.pallas_call(
        gather_selected_kernel,
        out_shape=jax.ShapeDtypeStruct((N, T, H), pool_tokens.dtype),
        grid_spec=pltpu.PrefetchScalarGridSpec(
            num_scalar_prefetch=1,
            grid=(1,),
            in_specs=[pl.BlockSpec(memory_space=pl.ANY)],
            out_specs=pl.BlockSpec(memory_space=pl.ANY),
            scratch_shapes=[pltpu.SemaphoreType.DMA((depth,))],
        ),
    )(knowledge_shifting_ids, pool_tokens)

    # Small per-row gathers: pure indexing glue (equivalent to the
    # flatten + offsets indexing in the PyTorch code).
    batch = jnp.arange(N)
    shifted_knowledge_use = pool_use[batch, knowledge_shifting_ids]
    shifted_knowledge_mask = knowledge_shifting_pool_mask[batch, knowledge_shifting_ids]
    shifted_knowledge_shifting_index = knowledge_shifting_pool[batch, knowledge_shifting_ids]

    return (knowledge_shifting_score, shifted_knowledge_encoded,
            shifted_knowledge_mask, shifted_knowledge_use,
            shifted_knowledge_shifting_index)


# ----------------------------- pure-JAX reference -------------------------- #

def reference_forward(params, contexts_encoded, tracked, pool_enc, pool_mask,
                      ck_mask, label, pool, mode="train"):
    """Original (un-folded) formulation in f32, mirroring the torch module."""
    query_use = contexts_encoded[1][:, 2, :]
    pool_tokens, pool_use = pool_enc
    Wc_t = params["Wc_t"].astype(jnp.float32)     # [2H, H]
    Wk = params["Wk"].astype(jnp.float32)         # [H, H] torch [out,in]
    bc = params["bc"][0]
    bk = params["bk"][0]
    qcat = jnp.concatenate([query_use, tracked], axis=1)
    cq = qcat @ Wc_t + bc                                       # project_c_q_k
    kp = pool_use @ Wk.T + bk                                   # project_k
    score = jnp.einsum("nkh,nh->nk", kp, cq)                    # bmm
    score = jnp.where(ck_mask, score, NEGINF)
    ids = label if mode == "train" else jnp.argmax(score, axis=1)
    b = jnp.arange(pool_tokens.shape[0])
    return (score, pool_tokens[b, ids], pool_mask[b, ids], pool_use[b, ids],
            pool[b, ids])


if __name__ == "__main__":
    N, K, T, H = 2, 4, 8, 32
    key = jax.random.PRNGKey(0)
    kp_, kc, kt, ke, ku, km, kl = jax.random.split(key, 7)

    params = init_params(kp_, H)

    # contexts_encoded[0] is unused by the forward; pass a small dummy.
    ctx_tokens = jnp.zeros((N, 3, T, H), jnp.float32)
    ctx_pooled = jax.random.normal(kc, (N, 3, H), jnp.float32)
    contexts_encoded = (ctx_tokens, ctx_pooled)
    tracked_knowledge_use = jax.random.normal(kt, (N, H), jnp.float32)

    pool_tokens = jax.random.normal(ke, (N, K, T, H), jnp.float32)
    pool_use = jax.random.normal(ku, (N, K, H), jnp.float32)
    knowledge_shifting_pool_encoded = (pool_tokens, pool_use)

    knowledge_shifting_pool_mask = jax.random.uniform(km, (N, K, T)) > 0.3
    shifting_ck_mask = jnp.array([[True, True, False, True],
                                  [True, False, True, True]])
    knowledge_shifting_label = jnp.array([1, 3], dtype=jnp.int32)
    knowledge_shifting_pool = jax.random.randint(kl, (N, K, T), 0, 1000,
                                                 dtype=jnp.int32)

    outs = knowledge_shifter_forward(
        params, contexts_encoded, tracked_knowledge_use,
        knowledge_shifting_pool_encoded, knowledge_shifting_pool_mask,
        shifting_ck_mask, knowledge_shifting_label, knowledge_shifting_pool,
        mode="train")
    outs = jax.block_until_ready(outs)

    refs = reference_forward(
        params, contexts_encoded, tracked_knowledge_use,
        knowledge_shifting_pool_encoded, knowledge_shifting_pool_mask,
        shifting_ck_mask, knowledge_shifting_label, knowledge_shifting_pool,
        mode="train")
    refs = jax.block_until_ready(refs)

    # bf16 MXU matmuls + algebraic Wk-fold re-association -> modest tolerance
    # on the score; everything downstream of the selection is an exact copy.
    assert np.allclose(np.asarray(outs[0]), np.asarray(refs[0]), rtol=2e-2, atol=2e-2)
    assert np.allclose(np.asarray(outs[1]), np.asarray(refs[1]), atol=1e-6)
    assert np.array_equal(np.asarray(outs[2]), np.asarray(refs[2]))
    assert np.allclose(np.asarray(outs[3]), np.asarray(refs[3]), atol=1e-6)
    assert np.array_equal(np.asarray(outs[4]), np.asarray(refs[4]))
    print("KERNEL_OK")
</pallas_src>

<mosaic_0001>
module attributes {stable_mosaic.version = 11 : i64} {
  func.func @shifter_score_kernel(%arg0: i32, %arg1: memref<2x64xbf16, #tpu.memory_space<vmem>>, %arg2: memref<64x32xbf16, #tpu.memory_space<vmem>>, %arg3: memref<1x32xf32, #tpu.memory_space<vmem>>, %arg4: memref<32x32xbf16, #tpu.memory_space<vmem>>, %arg5: memref<1x32xf32, #tpu.memory_space<vmem>>, %arg6: memref<2x4x32xf32, #tpu.memory_space<vmem>>, %arg7: memref<2x128xf32, #tpu.memory_space<vmem>>) attributes {dimension_semantics = [#tpu.dimension_semantics<parallel>], iteration_bounds = array<i64: 1>, scalar_prefetch = 0 : i64, scratch_operands = 0 : i64, tpu.core_type = #tpu.core_type<tc>, window_params = [{transform_indices = @transform_0, window_bounds = array<i64: 2, 64>}, {pipeline_mode = #tpu.pipeline_mode<synchronous>, transform_indices = @transform_1, window_bounds = array<i64: 64, 32>}, {pipeline_mode = #tpu.pipeline_mode<synchronous>, transform_indices = @transform_2, window_bounds = array<i64: 1, 32>}, {pipeline_mode = #tpu.pipeline_mode<synchronous>, transform_indices = @transform_3, window_bounds = array<i64: 32, 32>}, {pipeline_mode = #tpu.pipeline_mode<synchronous>, transform_indices = @transform_4, window_bounds = array<i64: 1, 32>}, {transform_indices = @transform_5, window_bounds = array<i64: 2, 4, 32>}, {transform_indices = @transform_6, window_bounds = array<i64: 2, 128>}]} {
    %c0 = arith.constant 0 : index
    %c0_0 = arith.constant 0 : index
    %0 = vector.load %arg1[%c0, %c0_0] : memref<2x64xbf16, #tpu.memory_space<vmem>>, vector<2x64xbf16>
    %c0_1 = arith.constant 0 : index
    %c0_2 = arith.constant 0 : index
    %1 = vector.load %arg2[%c0_1, %c0_2] : memref<64x32xbf16, #tpu.memory_space<vmem>>, vector<64x32xbf16>
    %cst = arith.constant dense<0.000000e+00> : vector<2x32xf32>
    %2 = tpu.matmul %0, %1, %cst {dimension_numbers = #tpu.dot_dimension_numbers<[1], [0], [0], [1], [0, 0, 1, 1], [], []>} : vector<2x64xbf16>, vector<64x32xbf16>, vector<2x32xf32> -> vector<2x32xf32>
    %c0_3 = arith.constant 0 : index
    %c0_4 = arith.constant 0 : index
    %3 = vector.load %arg3[%c0_3, %c0_4] : memref<1x32xf32, #tpu.memory_space<vmem>>, vector<1x32xf32>
    %4 = vector.broadcast %3 : vector<1x32xf32> to vector<2x32xf32>
    %5 = arith.addf %2, %4 : vector<2x32xf32>
    %6 = arith.truncf %5 : vector<2x32xf32> to vector<2x32xbf16>
    %c0_5 = arith.constant 0 : index
    %c0_6 = arith.constant 0 : index
    %7 = vector.load %arg4[%c0_5, %c0_6] : memref<32x32xbf16, #tpu.memory_space<vmem>>, vector<32x32xbf16>
    %cst_7 = arith.constant dense<0.000000e+00> : vector<2x32xf32>
    %8 = tpu.matmul %6, %7, %cst_7 {dimension_numbers = #tpu.dot_dimension_numbers<[1], [0], [0], [1], [0, 0, 1, 1], [], []>} : vector<2x32xbf16>, vector<32x32xbf16>, vector<2x32xf32> -> vector<2x32xf32>
    %c0_8 = arith.constant 0 : index
    %c0_9 = arith.constant 0 : index
    %9 = vector.load %arg5[%c0_8, %c0_9] : memref<1x32xf32, #tpu.memory_space<vmem>>, vector<1x32xf32>
    %10 = vector.broadcast %9 : vector<1x32xf32> to vector<2x32xf32>
    %11 = arith.mulf %5, %10 : vector<2x32xf32>
    %cst_10 = arith.constant dense<0.000000e+00> : vector<2xf32>
    %12 = vector.multi_reduction <add>, %11, %cst_10 [1] : vector<2x32xf32> to vector<2xf32>
    %13 = vector.shape_cast %12 : vector<2xf32> to vector<2x1xf32>
    %c0_11 = arith.constant 0 : index
    %c0_12 = arith.constant 0 : index
    %c0_13 = arith.constant 0 : index
    %14 = vector.load %arg6[%c0_11, %c0_12, %c0_13] : memref<2x4x32xf32, #tpu.memory_space<vmem>>, vector<2x4x32xf32>
    %15 = vector.shape_cast %8 : vector<2x32xf32> to vector<2x1x32xf32>
    %16 = vector.broadcast %15 : vector<2x1x32xf32> to vector<2x4x32xf32>
    %17 = arith.mulf %14, %16 : vector<2x4x32xf32>
    %cst_14 = arith.constant dense<0.000000e+00> : vector<2x4xf32>
    %18 = vector.multi_reduction <add>, %17, %cst_14 [2] : vector<2x4x32xf32> to vector<2x4xf32>
    %19 = vector.broadcast %13 : vector<2x1xf32> to vector<2x4xf32>
    %20 = arith.addf %18, %19 : vector<2x4xf32>
    %cst_15 = arith.constant -1.000000e+20 : f32
    %21 = vector.broadcast %cst_15 : f32 to vector<2x128xf32>
    %c0_16 = arith.constant 0 : index
    %c0_17 = arith.constant 0 : index
    %22 = vector.load %arg7[%c0_16, %c0_17] : memref<2x128xf32, #tpu.memory_space<vmem>>, vector<2x128xf32>
    tpu.vector_store %arg7[%c0_16, %c0_17], %21 {strides = array<i32>} : memref<2x128xf32, #tpu.memory_space<vmem>>, vector<2x128xf32>,
    %c0_18 = arith.constant 0 : index
    %c0_19 = arith.constant 0 : index
    %23 = vector.load %arg7[%c0_18, %c0_19] : memref<2x128xf32, #tpu.memory_space<vmem>>, vector<2x4xf32>
    tpu.vector_store %arg7[%c0_18, %c0_19], %20 {strides = array<i32>} : memref<2x128xf32, #tpu.memory_space<vmem>>, vector<2x4xf32>,
    return
  }
  func.func @transform_0(%arg0: i32) -> (i32, i32) {
    %c0_i32 = arith.constant 0 : i32
    %c0_i32_0 = arith.constant 0 : i32
    return %arg0, %c0_i32 : i32, i32
  }
  func.func @transform_1(%arg0: i32) -> (i32, i32) {
    %c0_i32 = arith.constant 0 : i32
    %c0_i32_0 = arith.constant 0 : i32
    %c0_i32_1 = arith.constant 0 : i32
    return %c0_i32, %c0_i32_0 : i32, i32
  }
  func.func @transform_2(%arg0: i32) -> (i32, i32) {
    %c0_i32 = arith.constant 0 : i32
    %c0_i32_0 = arith.constant 0 : i32
    %c0_i32_1 = arith.constant 0 : i32
    return %c0_i32, %c0_i32_0 : i32, i32
  }
  func.func @transform_3(%arg0: i32) -> (i32, i32) {
    %c0_i32 = arith.constant 0 : i32
    %c0_i32_0 = arith.constant 0 : i32
    %c0_i32_1 = arith.constant 0 : i32
    return %c0_i32, %c0_i32_0 : i32, i32
  }
  func.func @transform_4(%arg0: i32) -> (i32, i32) {
    %c0_i32 = arith.constant 0 : i32
    %c0_i32_0 = arith.constant 0 : i32
    %c0_i32_1 = arith.constant 0 : i32
    return %c0_i32, %c0_i32_0 : i32, i32
  }
  func.func @transform_5(%arg0: i32) -> (i32, i32, i32) {
    %c0_i32 = arith.constant 0 : i32
    %c0_i32_0 = arith.constant 0 : i32
    %c0_i32_1 = arith.constant 0 : i32
    return %arg0, %c0_i32, %c0_i32_0 : i32, i32, i32
  }
  func.func @transform_6(%arg0: i32) -> (i32, i32) {
    %c0_i32 = arith.constant 0 : i32
    %c0_i32_0 = arith.constant 0 : i32
    return %arg0, %c0_i32 : i32, i32
  }
}

</mosaic_0001>

<llo_original>
// kernel: tpu_custom_call.1
$region0: #{tpu_custom_call.1}
  #allocation0 [shape = 'u32[]', space=smem, size = 0x4, offset = 0x4, fixed_abs, tag = 'smem constant byte address 0x4 - core index']
  #allocation1 [shape = 'u32[144,128]{1,0:T(1,128)}', space=vmem, size = 0x12000, scoped, tag = 'internal scratch']
  %s0 = inlined_call_operand.vmem [shape: bf16[2,64], index: 0, kind: input, shape index: {}]
  %s1 = inlined_call_operand.vmem [shape: bf16[64,32], index: 1, kind: input, shape index: {}]
  %s2 = inlined_call_operand.vmem [shape: f32[1,32], index: 2, kind: input, shape index: {}]
  %s3 = inlined_call_operand.vmem [shape: bf16[32,32], index: 3, kind: input, shape index: {}]
  %s4 = inlined_call_operand.vmem [shape: f32[1,32], index: 4, kind: input, shape index: {}]
  %s5 = inlined_call_operand.vmem [shape: f32[2,4,32], index: 5, kind: input, shape index: {}]
  %s6 = inlined_call_operand.hbm [shape: f32[2,128], index: 6, kind: output, shape index: {}]
  %s7 = sld [smem:[#allocation0]]
  $region34: #{tpu_custom_call.1} parent=0
    _
  %s9 = ssub.s32 1, %s7
  %s10 = scalar_select 0, %s9, %s7
  $region1: #{tpu_custom_call.1} parent=0
    #allocation2 [shape = 'u8[1024]{0}', space=vmem, size = 0x400, scoped, tag = 'output window, operand 0, single buffered']
    #allocation3 [shape = 's32[1]{0}', space=sflag, size = 0x4, scoped, tag = 'scoped memory for tpu_custom_call.1']
    %11 = vsyncpa [#allocation3], 0
    // Predicated region
    $region2: #{tpu_custom_call.1} parent=1 // pred_check
      _
    $region3: #{tpu_custom_call.1} parent=1 // pred_check_branch
      %13 = sbr.rel (0) target = $region5
    $region4: #{tpu_custom_call.1} parent=1 // pred_region
      _
    $region5: #{tpu_custom_call.1} parent=1 // pred_fallthru
      _
    // Predicated region
    $region6: #{tpu_custom_call.1} parent=1 // pred_check
      _
    $region7: #{tpu_custom_call.1} parent=1 // pred_check_branch
      %15 = sbr.rel (0) target = $region9
    $region8: #{tpu_custom_call.1} parent=1 // pred_region
      _
    $region9: #{tpu_custom_call.1} parent=1 // pred_fallthru
      _
    // Predicated region
    $region10: #{tpu_custom_call.1} parent=1 // pred_check
      _
    $region11: #{tpu_custom_call.1} parent=1 // pred_check_branch
      %17 = sbr.rel (0) target = $region13
    $region12: #{tpu_custom_call.1} parent=1 // pred_region
      _
    $region13: #{tpu_custom_call.1} parent=1 // pred_fallthru
      _
    // Predicated region
    $region14: #{tpu_custom_call.1} parent=1 // pred_check
      _
    $region15: #{tpu_custom_call.1} parent=1 // pred_check_branch
      %19 = sbr.rel (0) target = $region17
    $region16: #{tpu_custom_call.1} parent=1 // pred_region
      _
    $region17: #{tpu_custom_call.1} parent=1 // pred_fallthru
      _
    // Predicated region
    $region18: #{tpu_custom_call.1} parent=1 // pred_check
      _
    $region19: #{tpu_custom_call.1} parent=1 // pred_check_branch
      %21 = sbr.rel (0) target = $region21
    $region20: #{tpu_custom_call.1} parent=1 // pred_region
      _
    $region21: #{tpu_custom_call.1} parent=1 // pred_fallthru
      _
    // Predicated region
    $region22: #{tpu_custom_call.1} parent=1 // pred_check
      _
    $region23: #{tpu_custom_call.1} parent=1 // pred_check_branch
      %23 = sbr.rel (0) target = $region25
    $region24: #{tpu_custom_call.1} parent=1 // pred_region
      _
    $region25: #{tpu_custom_call.1} parent=1 // pred_fallthru
      _
    %v25 = vld [vmem:[%s0] sm:$0x1]
    %v26 = vld [vmem:[%s1] sm:$0xf]
    %v27 = vld [vmem:[%s1 + $0x4] sm:$0xf]
    %v28 = vld [vmem:[%s1 + $0x8] sm:$0xf]
    %v29 = vld [vmem:[%s1 + $0xc] sm:$0xf]
    %v30 = vld [vmem:[%s1 + $0x10] sm:$0xf]
    %v31 = vld [vmem:[%s1 + $0x14] sm:$0xf]
    %v32 = vld [vmem:[%s1 + $0x18] sm:$0xf]
    %v33 = vld [vmem:[%s1 + $0x1c] sm:$0xf]
    %v34 = vld [vmem:[%s2] sm:$0x1]
    %v36 = vlaneseq
    %v37 = vshrl.u32 %v36, 7
    %v38 = vsub.s32 0, %v37
    %v39 = vrot.slane %v34, %v38
    %v49 = vunpack.c.l.b16 %v26
    %v50 = vunpack.c.l.b16 %v27
    %v51 = vunpack.c.l.b16 %v28
    %v52 = vunpack.c.l.b16 %v29
    %v53 = vunpack.c.l.b16 %v30
    %v54 = vunpack.c.l.b16 %v31
    %v55 = vunpack.c.l.b16 %v32
    %v56 = vunpack.c.l.b16 %v33
    %v57 = vpack.c.b16 %v50, %v49
    %v58 = vpack.c.b16 %v52, %v51
    %v59 = vpack.c.b16 %v54, %v53
    %v60 = vpack.c.b16 %v56, %v55
    %vm65 = vcmask 523264
    %v67 = vsel %vm65, %v25, 0
    %69 = vmatprep.subr.bf16.mxu0 0
    %70 = vmatpush1.bf16.msra.mxu0 %v57
    %71 = vmatprep.subr.bf16.mxu0 0
    %72 = vmatpush1.bf16.msra.mxu0 %v58
    %73 = vmatprep.subr.bf16.mxu0 0
    %74 = vmatpush1.bf16.msra.mxu0 %v59
    %75 = vmatprep.subr.bf16.mxu0 0
    %76 = vmatpush1.bf16.msra.mxu0 %v60
    %77 = vmatprep.subr.bf16.mxu0 0
    %78 = vmatpush1.bf16.msra.mxu0 0
    %79 = vmatprep.subr.bf16.mxu0 0
    %80 = vmatpush1.bf16.msra.mxu0 0
    %81 = vmatprep.subr.bf16.mxu0 0
    %82 = vmatpush1.bf16.msra.mxu0 0
    %83 = vmatprep.subr.bf16.mxu0 0
    %84 = vmatpush1.bf16.msra.mxu0 0
    %85 = vmatprep.subr.bf16.mxu0 0
    %86 = vmatpush1.bf16.msra.mxu0 0
    %87 = vmatprep.subr.bf16.mxu0 0
    %88 = vmatpush1.bf16.msra.mxu0 0
    %89 = vmatprep.subr.bf16.mxu0 0
    %90 = vmatpush1.bf16.msra.mxu0 0
    %91 = vmatprep.subr.bf16.mxu0 0
    %92 = vmatpush1.bf16.msra.mxu0 0
    %93 = vmatprep.subr.bf16.mxu0 0
    %94 = vmatpush1.bf16.msra.mxu0 0
    %95 = vmatprep.subr.bf16.mxu0 0
    %96 = vmatpush1.bf16.msra.mxu0 0
    %97 = vmatprep.subr.bf16.mxu0 0
    %98 = vmatpush1.bf16.msra.mxu0 0
    %99 = vmatprep.subr.bf16.mxu0 0
    %100 = vmatpush1.bf16.msra.mxu0 0
    %101 = vmatprep.mubr.bf16.mxu0 0
    %102 = vmatmul.mubr.bf16.gmra.mrb[0].mxu0 %v67
    %v103 = vpop.f32.mrb[0].mxu0
    %v104 = vadd.f32 %v39, %v103
    %v105 = vpop.f32.mrb[0].mxu0
    %v106 = vpop.f32.mrb[0].mxu0
    %v107 = vpop.f32.mrb[0].mxu0
    %108 = vdwg.mxu0
    %v109 = vpack.c.bf16 %v104, %v104
    %v110 = vld [vmem:[%s3] sm:$0xf]
    %v111 = vld [vmem:[%s3 + $0x4] sm:$0xf]
    %v112 = vld [vmem:[%s3 + $0x8] sm:$0xf]
    %v113 = vld [vmem:[%s3 + $0xc] sm:$0xf]
    %v118 = vunpack.c.l.b16 %v110
    %v119 = vunpack.c.l.b16 %v111
    %v120 = vunpack.c.l.b16 %v112
    %v121 = vunpack.c.l.b16 %v113
    %v122 = vpack.c.b16 %v119, %v118
    %v123 = vpack.c.b16 %v121, %v120
    %vm126 = vcmask 261120
    %v128 = vsel %vm126, %v109, 0
    %130 = vmatprep.subr.bf16.mxu0 0
    %131 = vmatpush1.bf16.msra.mxu0 %v122
    %132 = vmatprep.subr.bf16.mxu0 0
    %133 = vmatpush1.bf16.msra.mxu0 %v123
    %134 = vmatprep.subr.bf16.mxu0 0
    %135 = vmatpush1.bf16.msra.mxu0 0
    %136 = vmatprep.subr.bf16.mxu0 0
    %137 = vmatpush1.bf16.msra.mxu0 0
    %138 = vmatprep.subr.bf16.mxu0 0
    %139 = vmatpush1.bf16.msra.mxu0 0
    %140 = vmatprep.subr.bf16.mxu0 0
    %141 = vmatpush1.bf16.msra.mxu0 0
    %142 = vmatprep.subr.bf16.mxu0 0
    %143 = vmatpush1.bf16.msra.mxu0 0
    %144 = vmatprep.subr.bf16.mxu0 0
    %145 = vmatpush1.bf16.msra.mxu0 0
    %146 = vmatprep.subr.bf16.mxu0 0
    %147 = vmatpush1.bf16.msra.mxu0 0
    %148 = vmatprep.subr.bf16.mxu0 0
    %149 = vmatpush1.bf16.msra.mxu0 0
    %150 = vmatprep.subr.bf16.mxu0 0
    %151 = vmatpush1.bf16.msra.mxu0 0
    %152 = vmatprep.subr.bf16.mxu0 0
    %153 = vmatpush1.bf16.msra.mxu0 0
    %154 = vmatprep.subr.bf16.mxu0 0
    %155 = vmatpush1.bf16.msra.mxu0 0
    %156 = vmatprep.subr.bf16.mxu0 0
    %157 = vmatpush1.bf16.msra.mxu0 0
    %158 = vmatprep.subr.bf16.mxu0 0
    %159 = vmatpush1.bf16.msra.mxu0 0
    %160 = vmatprep.subr.bf16.mxu0 0
    %161 = vmatpush1.bf16.msra.mxu0 0
    %162 = vmatprep.mubr.bf16.mxu0 0
    %163 = vmatmul.mubr.bf16.gmra.mrb[0].mxu0 %v128
    %v164 = vpop.f32.mrb[0].mxu0
    %v165 = vadd.f32 0.0, %v164
    %v166 = vpop.f32.mrb[0].mxu0
    %v167 = vpop.f32.mrb[0].mxu0
    %v168 = vpop.f32.mrb[0].mxu0
    %169 = vdwg.mxu0
    %v170 = vld [vmem:[%s4] sm:$0x1]
    %v172 = vlaneseq
    %v173 = vshrl.u32 %v172, 7
    %v174 = vsub.s32 0, %v173
    %v175 = vrot.slane %v170, %v174
    %v177 = vmul.f32 %v104, %v175
    %vm178 = vcmask 254976
    %v179 = vsel %vm178, %v177, 0.0
    %180 = vadd.xlane.f32.xlu0 %v179
    %v181 = vpop.xlane.xlu0 %180
    %v182 = vld [vmem:[%s5] sm:$0xf]
    %v183 = vld [vmem:[%s5 + $0x4] sm:$0xf]
    %v186 = vunpack.c.l.s4 1966171168
    %v187 = vunpack.c.0.s8 %v186
    %v188 = vlaneseq
    %v189 = vshrl.u32 %v188, 7
    %v190 = vsub.s32 %v187, %v189
    %v191 = vrot.slane %v165, %v190
    %v192 = vcombine.high %v191, %v191
    %v194 = vunpack.c.l.s4 1966171168
    %v195 = vunpack.c.0.s8 %v194
    %v196 = vlaneseq
    %v197 = vshrl.u32 %v196, 7
    %v198 = vsub.s32 %v195, %v197
    %v199 = vrot.slane %v191, %v198
    %v201 = vunpack.c.l.s4 1966171168
    %v202 = vunpack.c.0.s8 %v201
    %v203 = vlaneseq
    %v204 = vshrl.u32 %v203, 7
    %v205 = vsub.s32 %v202, %v204
    %v206 = vrot.slane %v192, %v205
    %v207 = vlaneseq
    %v208 = vshrl.u32 %v207, 7
    %v209 = vsub.s32 0, %v208
    %v210 = vrot.slane %v199, %v209
    %v211 = vlaneseq
    %v212 = vshrl.u32 %v211, 7
    %v213 = vsub.s32 0, %v212
    %v214 = vrot.slane %v206, %v213
    %v217 = vmul.f32 %v182, %v210
    %v218 = vmul.f32 %v183, %v214
    %vm219 = vcmask 257024
    %v220 = vsel %vm219, %v217, 0.0
    %221 = vadd.xlane.f32.xlu0 %v220
    %v222 = vpop.xlane.xlu0 %221
    %v223 = vsel %vm219, %v218, 0.0
    %224 = vadd.xlane.f32.xlu0 %v223
    %v225 = vpop.xlane.xlu0 %224
    %v227 = vlaneseq
    %v228 = vshrl.u32 %v227, 7
    %v229 = vsub.s32 0, %v228
    %v230 = vrot.slane %v181, %v229
    %v231 = vlaneseq
    %v232 = vshrl.u32 %v231, 7
    %v233 = vsub.s32 1, %v232
    %v234 = vrot.slane %v181, %v233
    %v237 = vadd.f32 %v222, %v230
    %v238 = vadd.f32 %v225, %v234
    %239 = vst [vmem:[#allocation2] sm:$0x3] -1e+20
    %242 = vset.pattern.permute.xlu0 0
    %243 = vperm.xlu0 %242, %v237
    %v244 = vpop.permute.xlu0 %243
    %245 = vset.pattern.permute.xlu0 0
    %246 = vperm.xlu0 %245, %v238
    %v247 = vpop.permute.xlu0 %246
    %v248 = vlaneseq
    %v249 = vand.u32 %v248, 127
    %v250 = vlaneseq
    %v251 = vshrl.u32 %v250, 7
    %v252 = vsub.s32 %v249, %v251
    %v253 = vrot.slane %v244, %v252
    %v254 = vlaneseq
    %v255 = vshrl.u32 %v254, 7
    %v256 = vsub.s32 %v249, %v255
    %v257 = vrot.slane %v247, %v256
    %vm258 = vcmask 1041409
    %v259 = vsel %vm258, %v257, %v253
    %vm261 = vcmask 25600
    %262 = vst.msk [vmem:[#allocation2] sm:$0x3] %vm261, %v259
    // Predicated region
    $region26: #{tpu_custom_call.1} parent=1 // pred_check
      _
    $region27: #{tpu_custom_call.1} parent=1 // pred_check_branch
      %264 = sbr.rel (0) target = $region29
    $region28: #{tpu_custom_call.1} parent=1 // pred_region
      %s266 = ssub.s32 32, 32
      %267 = vsyncadd [#allocation3], %s266
      %s269 = sshll.u32 [#allocation2], 4
      %s270 = int_to_ptr.vmem [resolvable:$true] %s269
      %272 = dma.vmem_to_hbm [thread:$0]  %s270, 32, %s6, [#allocation3]
    $region29: #{tpu_custom_call.1} parent=1 // pred_fallthru
      _
    // Predicated region
    $region30: #{tpu_custom_call.1} parent=1 // pred_check
      _
    $region31: #{tpu_custom_call.1} parent=1 // pred_check_branch
      %274 = sbr.rel (0) target = $region33
    $region32: #{tpu_custom_call.1} parent=1 // pred_region
      %275 = dma.done [#allocation3], 32
    $region33: #{tpu_custom_call.1} parent=1 // pred_fallthru
      _
    %276 = vsyncpa [#allocation3], 1

</llo_original>
